<compile_context>
chip_gen: v6e
topology: v6e:2x2x1
jax: 0.10.0
libtpu: 0.0.40
codegen_flags: <defaults>
</compile_context>

<pallas_src>
import functools

import jax
import jax.numpy as jnp
from jax.experimental import pallas as pl
from jax.experimental.pallas import tpu as pltpu

EPS = 1e-6
NS_ITERS = 15


def _eye(n, dtype=jnp.float32):
    r = jax.lax.broadcasted_iota(jnp.int32, (n, n), 0)
    c = jax.lax.broadcasted_iota(jnp.int32, (n, n), 1)
    return (r == c).astype(dtype)


def _newton_schulz_sqrtm(A, I=None, mm_dtype=jnp.float32):
    """MatrixSquareRoot.forward (15 Newton-Schulz iterations).

    f32 by default; mm_dtype=bf16 gives a mixed-precision variant (bf16 MXU
    operands, f32 accumulation) for v5e where the f32 epilogue is the floor.
    Usable both inside the Pallas kernel and in plain JAX.
    """
    n = A.shape[0]
    if I is None:
        I = _eye(n, jnp.float32)
    norm = jnp.sqrt(jnp.sum(A * A))
    Y0 = A / norm
    threeI = 3.0 * I  # hoisted out of the iteration

    def body(_, carry):
        Y, Z = carry
        Ym = Y.astype(mm_dtype)
        Zm = Z.astype(mm_dtype)
        T = 0.5 * (threeI - jnp.dot(Zm, Ym, preferred_element_type=jnp.float32))
        Tm = T.astype(mm_dtype)
        Y = jnp.dot(Ym, Tm, preferred_element_type=jnp.float32)
        Z = jnp.dot(Tm, Zm, preferred_element_type=jnp.float32)
        return Y, Z

    # unroll=False: 15 unrolled NxN matmuls only inflate live ranges / VMEM.
    Y, _ = jax.lax.fori_loop(0, NS_ITERS, body, (Y0, I), unroll=False)
    return Y * jnp.sqrt(norm)


def _tex_loss_kernel(ttg_ref, tm_ref, stgT_hbm, x_ref, loss_ref,
                     s_acc, rs_row, ones_ref, stg_vmem, stg_sem,
                     *, true_k, tk, b_div, needs_mask, ns_mm_dtype):
    k = pl.program_id(0)
    nk = pl.num_programs(0)

    @pl.when(k == 0)
    def _init():
        s_acc[...] = jnp.zeros_like(s_acc)
        rs_row[...] = jnp.zeros_like(rs_row)
        ones_ref[...] = jnp.ones_like(ones_ref)      # hoisted ones row (once)
        # Single-buffered manual DMA of sqrtTargetG^T; only waited in the epilogue,
        # so it is fully hidden under the K streaming and never double-buffered.
        pltpu.make_async_copy(stgT_hbm, stg_vmem, stg_sem).start()

    # ---- streaming phase: accumulate Gram and row sums (f32 accumulation) ----
    x = x_ref[...]                                    # (N, TK) stream-dtype block
    if needs_mask:
        # zero the OOB tail of the last (partial) block; no-op for full blocks
        col = jax.lax.broadcasted_iota(jnp.int32, x.shape, 1)
        x = jnp.where(k * tk + col < true_k, x, jnp.zeros_like(x))

    # S += Xblk @ Xblk^T  (contract last dim of both; f32 accumulation on MXU)
    s_acc[...] += jax.lax.dot_general(
        x, x, dimension_numbers=(((1,), (1,)), ((), ())),
        preferred_element_type=jnp.float32)
    # lane-dense row sums via a tiny 1-row MXU matmul (rides in MXU slack)
    rs_row[...] += jax.lax.dot_general(
        ones_ref[...], x, dimension_numbers=(((1,), (1,)), ((), ())),
        preferred_element_type=jnp.float32)           # (1, N)

    # ---- epilogue: Gram finalize, Newton-Schulz, loss ----
    @pl.when(k == nk - 1)
    def _finish():
        n = s_acc.shape[0]
        inv_k = jnp.float32(1.0 / true_k)
        I = _eye(n, jnp.float32)
        rs_r = rs_row[...]                            # (1, N)

        # outer product r r^T via a rank-1 MXU matmul (once, in the epilogue)
        rr = jax.lax.dot_general(
            rs_r, rs_r, dimension_numbers=(((0,), (0,)), ((), ())),
            preferred_element_type=jnp.float32)       # (N, N)

        # G = ((X - M)(X - M)^T + EPS*I)/K = (S - r r^T / K)/K + (EPS/K) I
        G = (s_acc[...] - rr * inv_k) * inv_k + (EPS * inv_k) * I

        # trace(G) straight off the diagonal of the f32 G (no per-step accumulator)
        tr_g = jnp.sum(G * I)

        # mse_loss(M, targetM, reduction='sum'), lane-dense
        m_row = rs_r * inv_k
        mse = jnp.sum((m_row - tm_ref[...]) ** 2)

        # trace(sqrtm(G) @ sqrtTargetG) = sum(sqrtG * sqrtTargetG^T)
        sqrt_g = _newton_schulz_sqrtm(G, I, mm_dtype=ns_mm_dtype)
        pltpu.make_async_copy(stgT_hbm, stg_vmem, stg_sem).wait()
        tr_c = jnp.sum(sqrt_g * stg_vmem[...])

        loss_ref[0, 0] = (mse + tr_g + ttg_ref[0, 0] - 2.0 * tr_c) / b_div


def _choose_tk(n, k, itemsize):
    """Large K tiles: whole K in one block when small, else ~8 MiB of
    double-buffered X per step (multiple of 256) to amortize grid overhead."""
    if k <= 2048:
        return int(k)
    budget = 8 << 20
    tk = budget // (2 * n * itemsize)
    tk = max(512, min(4096, (tk // 256) * 256))
    return int(min(tk, k))


def tex_loss_forward(x, target_m_row, trace_target_g, sqrt_target_g_t,
                     *, stream_dtype=jnp.bfloat16, ns_mm_dtype=jnp.float32):
    """Equivalent of TexLossOptTransAlternative.forward.

    Args:
      x:               (a, b, c, d) input feature map.
      target_m_row:    (1, N) target mean (lane-dense), N = a*b.
      trace_target_g:  (1, 1) trace of targetG (scalar, rides in SMEM).
      sqrt_target_g_t: (N, N) transpose of sqrtTargetG (stays in HBM, manual DMA).
    Returns (input_unchanged, loss_scalar).
    """
    a, b, c, d = x.shape
    n, k_true = a * b, c * d
    X = x.reshape(n, k_true)
    if X.dtype != stream_dtype:
        # Stream X as bf16: halves the HBM bytes of the memory-bound phase.
        # Row sums / Gram see bf16-rounded inputs but keep f32 accumulation.
        X = X.astype(stream_dtype)

    stream_bytes = jnp.dtype(stream_dtype).itemsize
    tk = _choose_tk(n, k_true, stream_bytes)
    kt = pl.cdiv(k_true, tk)
    needs_mask = (k_true % tk) != 0   # ragged tail handled in-kernel, no jnp.pad

    kernel = functools.partial(
        _tex_loss_kernel, true_k=int(k_true), tk=int(tk), b_div=float(b),
        needs_mask=needs_mask, ns_mm_dtype=ns_mm_dtype)

    # Per-generation VMEM budget: query capacity, leave headroom for compiler scratch.
    try:
        vmem_cap = int(pltpu.get_tpu_info().vmem_capacity_bytes)
    except Exception:
        vmem_cap = 64 << 20
    vmem_est = (2 * n * tk * stream_bytes        # double-buffered X blocks
                + 2 * n * n * 4                  # S accumulator + sqrtTargetG^T buffer
                + 6 * n * n * 4                  # NS working set (G, Y, Z, T, I, tmp)
                + 2 * tk * stream_bytes + 8 * n * 4
                + (4 << 20))
    vmem_limit = int(min(vmem_cap - (8 << 20), max(32 << 20, vmem_est)))

    flops = (2.0 * n * n * k_true + 2.0 * n * k_true
             + NS_ITERS * 6.0 * float(n) ** 3 + 10.0 * n * n)
    bytes_accessed = n * k_true * stream_bytes + n * n * 4 + n * 4 + 16

    loss = pl.pallas_call(
        kernel,
        out_shape=jax.ShapeDtypeStruct((1, 1), jnp.float32),
        grid_spec=pltpu.PrefetchScalarGridSpec(
            num_scalar_prefetch=0,
            grid=(kt,),
            in_specs=[
                pl.BlockSpec(memory_space=pltpu.SMEM),          # trace(targetG)
                pl.BlockSpec((1, n), lambda kk: (0, 0)),        # targetM (lane-dense)
                pl.BlockSpec(memory_space=pl.ANY),              # sqrtTargetG^T in HBM
                pl.BlockSpec((n, tk), lambda kk: (0, kk)),      # streamed X blocks
            ],
            out_specs=pl.BlockSpec(memory_space=pltpu.SMEM),    # scalar loss
            scratch_shapes=[
                pltpu.VMEM((n, n), jnp.float32),    # S accumulator
                pltpu.VMEM((1, n), jnp.float32),    # row sums (lane-dense)
                pltpu.VMEM((1, tk), stream_dtype),  # hoisted ones row
                pltpu.VMEM((n, n), jnp.float32),    # sqrtTargetG^T landing buffer
                pltpu.SemaphoreType.DMA(()),        # its DMA semaphore
            ]),
        compiler_params=pltpu.CompilerParams(
            dimension_semantics=("arbitrary",),
            vmem_limit_bytes=vmem_limit),
        cost_estimate=pl.CostEstimate(
            flops=int(flops), transcendentals=2,
            bytes_accessed=int(bytes_accessed)),
    )(trace_target_g, target_m_row, sqrt_target_g_t, X)

    return x, loss[0, 0]


# ---------------- __init__ glue (target construction, plain JAX) --------------
def _gram_matrix(X):
    a, b = X.shape
    return (jnp.dot(X, X.T, preferred_element_type=jnp.float32)
            + EPS * jnp.eye(a, dtype=jnp.float32)) / b


def build_targets(target_feature_1, target_feature_2, weight):
    """Returns kernel-ready constants: targetM (1,N), trace(targetG) (1,1),
    sqrtTargetG^T (N,N)."""
    a, b, c, d = target_feature_1.shape
    n = a * b
    X1 = target_feature_1.reshape(n, c * d).astype(jnp.float32)
    X2 = target_feature_2.reshape(n, c * d).astype(jnp.float32)
    targetM = weight * X1.mean(1) + (1.0 - weight) * X2.mean(1)
    C1 = _gram_matrix(X1 - X1.mean(1, keepdims=True))
    C2 = _gram_matrix(X2 - X2.mean(1, keepdims=True))
    sqrtC1 = _newton_schulz_sqrtm(C1)
    W = _newton_schulz_sqrtm(sqrtC1 @ C2 @ sqrtC1)
    W = jnp.linalg.inv(sqrtC1) @ W
    sqrtTargetG = weight * sqrtC1 + (1.0 - weight) * W
    targetG = sqrtTargetG @ sqrtTargetG
    target_m_row = targetM.reshape(1, n).astype(jnp.float32)
    trace_target_g = jnp.trace(targetG).reshape(1, 1).astype(jnp.float32)
    sqrt_target_g_t = sqrtTargetG.T.astype(jnp.float32)
    return target_m_row, trace_target_g, sqrt_target_g_t


if __name__ == "__main__":
    key = jax.random.PRNGKey(0)
    k1, k2, k3 = jax.random.split(key, 3)

    # small shapes consistent with the module: input NCHW (a, b, c, d)
    a, b, c, d = 2, 4, 16, 16          # -> X is (8, 256), single K block
    weight = 0.7

    target_feature_1 = jax.random.normal(k1, (a, b, c, d), jnp.float32)
    target_feature_2 = jax.random.normal(k2, (a, b, c, d), jnp.float32)
    target_m_row, trace_target_g, sqrt_target_g_t = build_targets(
        target_feature_1, target_feature_2, weight)

    x = jax.random.normal(k3, (a, b, c, d), jnp.float32)

    out, loss = tex_loss_forward(x, target_m_row, trace_target_g, sqrt_target_g_t)
    jax.block_until_ready((out, loss))
    print("KERNEL_OK")
</pallas_src>

<mosaic_0001>
module attributes {stable_mosaic.version = 11 : i64} {
  func.func @_tex_loss_kernel(%arg0: i32, %arg1: memref<1x1xf32, #tpu.memory_space<smem>>, %arg2: memref<1x8xf32, #tpu.memory_space<vmem>>, %arg3: memref<8x8xf32, #tpu.memory_space<any>>, %arg4: memref<8x256xbf16, #tpu.memory_space<vmem>>, %arg5: memref<1x1xf32, #tpu.memory_space<smem>>, %arg6: memref<8x8xf32, #tpu.memory_space<vmem>>, %arg7: memref<1x8xf32, #tpu.memory_space<vmem>>, %arg8: memref<1x256xbf16, #tpu.memory_space<vmem>>, %arg9: memref<8x8xf32, #tpu.memory_space<vmem>>, %arg10: memref<!tpu.dma_semaphore, #tpu.memory_space<semaphore_mem>>) attributes {dimension_semantics = [#tpu.dimension_semantics<arbitrary>], iteration_bounds = array<i64: 1>, scalar_prefetch = 0 : i64, scratch_operands = 5 : i64, tpu.core_type = #tpu.core_type<tc>, window_params = [{transform_indices = @transform_0, window_bounds = array<i64: 1, 1>}, {pipeline_mode = #tpu.pipeline_mode<synchronous>, transform_indices = @transform_1, window_bounds = array<i64: 1, 8>}, {}, {transform_indices = @transform_3, window_bounds = array<i64: 8, 256>}, {transform_indices = @transform_4, window_bounds = array<i64: 1, 1>}]} {
    %c0_i32 = arith.constant 0 : i32
    %0 = arith.cmpi eq, %arg0, %c0_i32 : i32
    %1 = arith.extui %0 : i1 to i32
    %c0_i32_0 = arith.constant 0 : i32
    %2 = arith.cmpi ne, %1, %c0_i32_0 : i32
    scf.if %2 {
      %cst_15 = arith.constant 0.000000e+00 : f32
      %16 = vector.broadcast %cst_15 : f32 to vector<8x8xf32>
      %c0_16 = arith.constant 0 : index
      %c0_17 = arith.constant 0 : index
      %17 = vector.load %arg6[%c0_16, %c0_17] : memref<8x8xf32, #tpu.memory_space<vmem>>, vector<8x8xf32>
      tpu.vector_store %arg6[%c0_16, %c0_17], %16 {strides = array<i32>} : memref<8x8xf32, #tpu.memory_space<vmem>>, vector<8x8xf32>,
      %cst_18 = arith.constant 0.000000e+00 : f32
      %18 = vector.broadcast %cst_18 : f32 to vector<1x8xf32>
      %c0_19 = arith.constant 0 : index
      %c0_20 = arith.constant 0 : index
      %19 = vector.load %arg7[%c0_19, %c0_20] : memref<1x8xf32, #tpu.memory_space<vmem>>, vector<1x8xf32>
      tpu.vector_store %arg7[%c0_19, %c0_20], %18 {strides = array<i32>} : memref<1x8xf32, #tpu.memory_space<vmem>>, vector<1x8xf32>,
      %cst_21 = arith.constant 1.000000e+00 : bf16
      %20 = vector.broadcast %cst_21 : bf16 to vector<1x256xbf16>
      %c0_22 = arith.constant 0 : index
      %c0_23 = arith.constant 0 : index
      %21 = vector.load %arg8[%c0_22, %c0_23] : memref<1x256xbf16, #tpu.memory_space<vmem>>, vector<1x256xbf16>
      tpu.vector_store %arg8[%c0_22, %c0_23], %20 {strides = array<i32>} : memref<1x256xbf16, #tpu.memory_space<vmem>>, vector<1x256xbf16>,
      tpu.enqueue_dma source(%arg3 : memref<8x8xf32, #tpu.memory_space<any>>) target(%arg9 : memref<8x8xf32, #tpu.memory_space<vmem>>) target_semaphore(%arg10 : memref<!tpu.dma_semaphore, #tpu.memory_space<semaphore_mem>>)
    } else {
    }
    %c0 = arith.constant 0 : index
    %c0_1 = arith.constant 0 : index
    %3 = vector.load %arg4[%c0, %c0_1] : memref<8x256xbf16, #tpu.memory_space<vmem>>, vector<8x256xbf16>
    %c0_2 = arith.constant 0 : index
    %c0_3 = arith.constant 0 : index
    %4 = vector.load %arg6[%c0_2, %c0_3] : memref<8x8xf32, #tpu.memory_space<vmem>>, vector<8x8xf32>
    %cst = arith.constant dense<0.000000e+00> : vector<8x8xf32>
    %5 = tpu.matmul %3, %3, %cst {dimension_numbers = #tpu.dot_dimension_numbers<[1], [1], [0], [0], [0, 0, 1, 0], [], []>} : vector<8x256xbf16>, vector<8x256xbf16>, vector<8x8xf32> -> vector<8x8xf32>
    %6 = arith.addf %4, %5 : vector<8x8xf32>
    %c0_4 = arith.constant 0 : index
    %c0_5 = arith.constant 0 : index
    %7 = vector.load %arg6[%c0_4, %c0_5] : memref<8x8xf32, #tpu.memory_space<vmem>>, vector<8x8xf32>
    tpu.vector_store %arg6[%c0_4, %c0_5], %6 {strides = array<i32>} : memref<8x8xf32, #tpu.memory_space<vmem>>, vector<8x8xf32>,
    %c0_6 = arith.constant 0 : index
    %c0_7 = arith.constant 0 : index
    %8 = vector.load %arg7[%c0_6, %c0_7] : memref<1x8xf32, #tpu.memory_space<vmem>>, vector<1x8xf32>
    %c0_8 = arith.constant 0 : index
    %c0_9 = arith.constant 0 : index
    %9 = vector.load %arg8[%c0_8, %c0_9] : memref<1x256xbf16, #tpu.memory_space<vmem>>, vector<1x256xbf16>
    %cst_10 = arith.constant dense<0.000000e+00> : vector<1x8xf32>
    %10 = tpu.matmul %9, %3, %cst_10 {dimension_numbers = #tpu.dot_dimension_numbers<[1], [1], [0], [0], [0, 0, 1, 0], [], []>} : vector<1x256xbf16>, vector<8x256xbf16>, vector<1x8xf32> -> vector<1x8xf32>
    %11 = arith.addf %8, %10 : vector<1x8xf32>
    %c0_11 = arith.constant 0 : index
    %c0_12 = arith.constant 0 : index
    %12 = vector.load %arg7[%c0_11, %c0_12] : memref<1x8xf32, #tpu.memory_space<vmem>>, vector<1x8xf32>
    tpu.vector_store %arg7[%c0_11, %c0_12], %11 {strides = array<i32>} : memref<1x8xf32, #tpu.memory_space<vmem>>, vector<1x8xf32>,
    %c0_i32_13 = arith.constant 0 : i32
    %13 = arith.cmpi eq, %arg0, %c0_i32_13 : i32
    %14 = arith.extui %13 : i1 to i32
    %c0_i32_14 = arith.constant 0 : i32
    %15 = arith.cmpi ne, %14, %c0_i32_14 : i32
    scf.if %15 {
      %16 = tpu.iota {dimensions = array<i32: 0>} : vector<8x8xi32>
      %17 = tpu.iota {dimensions = array<i32: 1>} : vector<8x8xi32>
      %18 = arith.cmpi eq, %16, %17 : vector<8x8xi32>
      %19 = arith.extui %18 : vector<8x8xi1> to vector<8x8xi32>
      %20 = arith.sitofp %19 : vector<8x8xi32> to vector<8x8xf32>
      %c0_15 = arith.constant 0 : index
      %c0_16 = arith.constant 0 : index
      %21 = vector.load %arg7[%c0_15, %c0_16] : memref<1x8xf32, #tpu.memory_space<vmem>>, vector<1x8xf32>
      %cst_17 = arith.constant dense<0.000000e+00> : vector<8x8xf32>
      %22 = tpu.matmul %21, %21, %cst_17 {dimension_numbers = #tpu.dot_dimension_numbers<[0], [0], [1], [1], [0, 1, 1, 1], [], []>} : vector<1x8xf32>, vector<1x8xf32>, vector<8x8xf32> -> vector<8x8xf32>
      %c0_18 = arith.constant 0 : index
      %c0_19 = arith.constant 0 : index
      %23 = vector.load %arg6[%c0_18, %c0_19] : memref<8x8xf32, #tpu.memory_space<vmem>>, vector<8x8xf32>
      %cst_20 = arith.constant 3.906250e-03 : f32
      %24 = vector.broadcast %cst_20 : f32 to vector<8x8xf32>
      %25 = arith.mulf %22, %24 : vector<8x8xf32>
      %26 = arith.subf %23, %25 : vector<8x8xf32>
      %cst_21 = arith.constant 3.906250e-03 : f32
      %27 = vector.broadcast %cst_21 : f32 to vector<8x8xf32>
      %28 = arith.mulf %26, %27 : vector<8x8xf32>
      %cst_22 = arith.constant 9.99999997E-7 : f32
      %cst_23 = arith.constant 3.906250e-03 : f32
      %29 = arith.mulf %cst_22, %cst_23 : f32
      %30 = vector.broadcast %29 : f32 to vector<8x8xf32>
      %31 = arith.mulf %30, %20 : vector<8x8xf32>
      %32 = arith.addf %28, %31 : vector<8x8xf32>
      %33 = arith.mulf %32, %20 : vector<8x8xf32>
      %34 = vector.shape_cast %33 : vector<8x8xf32> to vector<1x8x8xf32>
      %cst_24 = arith.constant dense<0.000000e+00> : vector<1xf32>
      %35 = vector.multi_reduction <add>, %34, %cst_24 [1, 2] : vector<1x8x8xf32> to vector<1xf32>
      %36 = vector.shape_cast %35 : vector<1xf32> to vector<1x1x1xf32>
      %37 = vector.extract %36[0, 0, 0] : f32 from vector<1x1x1xf32>
      %cst_25 = arith.constant 3.906250e-03 : f32
      %38 = vector.broadcast %cst_25 : f32 to vector<1x8xf32>
      %39 = arith.mulf %21, %38 : vector<1x8xf32>
      %c0_26 = arith.constant 0 : index
      %c0_27 = arith.constant 0 : index
      %40 = vector.load %arg2[%c0_26, %c0_27] : memref<1x8xf32, #tpu.memory_space<vmem>>, vector<1x8xf32>
      %41 = arith.subf %39, %40 : vector<1x8xf32>
      %42 = arith.mulf %41, %41 : vector<1x8xf32>
      %43 = vector.shape_cast %42 : vector<1x8xf32> to vector<1x1x8xf32>
      %cst_28 = arith.constant dense<0.000000e+00> : vector<1xf32>
      %44 = vector.multi_reduction <add>, %43, %cst_28 [1, 2] : vector<1x1x8xf32> to vector<1xf32>
      %45 = vector.shape_cast %44 : vector<1xf32> to vector<1x1x1xf32>
      %46 = vector.extract %45[0, 0, 0] : f32 from vector<1x1x1xf32>
      %47 = arith.mulf %32, %32 : vector<8x8xf32>
      %48 = vector.shape_cast %47 : vector<8x8xf32> to vector<1x8x8xf32>
      %cst_29 = arith.constant dense<0.000000e+00> : vector<1xf32>
      %49 = vector.multi_reduction <add>, %48, %cst_29 [1, 2] : vector<1x8x8xf32> to vector<1xf32>
      %50 = vector.shape_cast %49 : vector<1xf32> to vector<1x1x1xf32>
      %51 = vector.extract %50[0, 0, 0] : f32 from vector<1x1x1xf32>
      %52 = math.sqrt %51 : f32
      %53 = vector.broadcast %52 : f32 to vector<8x8xf32>
      %54 = arith.divf %32, %53 : vector<8x8xf32>
      %cst_30 = arith.constant 3.000000e+00 : f32
      %55 = vector.broadcast %cst_30 : f32 to vector<8x8xf32>
      %56 = arith.mulf %55, %20 : vector<8x8xf32>
      %c0_i32_31 = arith.constant 0 : i32
      %c15_i32 = arith.constant 15 : i32
      %57 = arith.addi %c0_i32_31, %c15_i32 : i32
      %c1_i32 = arith.constant 1 : i32
      %58:2 = scf.for %arg11 = %c0_i32_31 to %57 step %c1_i32 iter_args(%arg12 = %54, %arg13 = %20) -> (vector<8x8xf32>, vector<8x8xf32>)  : i32 {
        %cst_41 = arith.constant dense<0.000000e+00> : vector<8x8xf32>
        %75 = tpu.matmul %arg13, %arg12, %cst_41 {dimension_numbers = #tpu.dot_dimension_numbers<[1], [0], [0], [1], [0, 0, 1, 1], [], []>} : vector<8x8xf32>, vector<8x8xf32>, vector<8x8xf32> -> vector<8x8xf32>
        %76 = arith.subf %56, %75 : vector<8x8xf32>
        %cst_42 = arith.constant 5.000000e-01 : f32
        %77 = vector.broadcast %cst_42 : f32 to vector<8x8xf32>
        %78 = arith.mulf %77, %76 : vector<8x8xf32>
        %cst_43 = arith.constant dense<0.000000e+00> : vector<8x8xf32>
        %79 = tpu.matmul %arg12, %78, %cst_43 {dimension_numbers = #tpu.dot_dimension_numbers<[1], [0], [0], [1], [0, 0, 1, 1], [], []>} : vector<8x8xf32>, vector<8x8xf32>, vector<8x8xf32> -> vector<8x8xf32>
        %cst_44 = arith.constant dense<0.000000e+00> : vector<8x8xf32>
        %80 = tpu.matmul %78, %arg13, %cst_44 {dimension_numbers = #tpu.dot_dimension_numbers<[1], [0], [0], [1], [0, 0, 1, 1], [], []>} : vector<8x8xf32>, vector<8x8xf32>, vector<8x8xf32> -> vector<8x8xf32>
        scf.yield %79, %80 : vector<8x8xf32>, vector<8x8xf32>
      }
      %59 = math.sqrt %52 : f32
      %60 = vector.broadcast %59 : f32 to vector<8x8xf32>
      %61 = arith.mulf %58#0, %60 : vector<8x8xf32>
      tpu.wait_dma2 semaphore(%arg10 : memref<!tpu.dma_semaphore, #tpu.memory_space<semaphore_mem>>) src(%arg3 : memref<8x8xf32, #tpu.memory_space<any>>) dst(%arg9 : memref<8x8xf32, #tpu.memory_space<vmem>>)
      %c0_32 = arith.constant 0 : index
      %c0_33 = arith.constant 0 : index
      %62 = vector.load %arg9[%c0_32, %c0_33] : memref<8x8xf32, #tpu.memory_space<vmem>>, vector<8x8xf32>
      %63 = arith.mulf %61, %62 : vector<8x8xf32>
      %64 = vector.shape_cast %63 : vector<8x8xf32> to vector<1x8x8xf32>
      %cst_34 = arith.constant dense<0.000000e+00> : vector<1xf32>
      %65 = vector.multi_reduction <add>, %64, %cst_34 [1, 2] : vector<1x8x8xf32> to vector<1xf32>
      %66 = vector.shape_cast %65 : vector<1xf32> to vector<1x1x1xf32>
      %67 = vector.extract %66[0, 0, 0] : f32 from vector<1x1x1xf32>
      %68 = arith.addf %46, %37 : f32
      %c0_35 = arith.constant 0 : index
      %c0_36 = arith.constant 0 : index
      %69 = memref.load %arg1[%c0_35, %c0_36] : memref<1x1xf32, #tpu.memory_space<smem>>
      %70 = arith.addf %68, %69 : f32
      %cst_37 = arith.constant 2.000000e+00 : f32
      %71 = arith.mulf %cst_37, %67 : f32
      %72 = arith.subf %70, %71 : f32
      %cst_38 = arith.constant 4.000000e+00 : f32
      %73 = arith.divf %72, %cst_38 : f32
      %c0_39 = arith.constant 0 : index
      %c0_40 = arith.constant 0 : index
      %74 = memref.load %arg5[%c0_39, %c0_40] : memref<1x1xf32, #tpu.memory_space<smem>>
      memref.store %73, %arg5[%c0_39, %c0_40] : memref<1x1xf32, #tpu.memory_space<smem>>
    } else {
    }
    return
  }
  func.func @transform_0(%arg0: i32) -> (i32, i32) {
    %c0_i32 = arith.constant 0 : i32
    %c0_i32_0 = arith.constant 0 : i32
    %c0_i32_1 = arith.constant 0 : i32
    return %c0_i32, %c0_i32_0 : i32, i32
  }
  func.func @transform_1(%arg0: i32) -> (i32, i32) {
    %c0_i32 = arith.constant 0 : i32
    %c0_i32_0 = arith.constant 0 : i32
    %c0_i32_1 = arith.constant 0 : i32
    return %c0_i32, %c0_i32_0 : i32, i32
  }
  func.func @transform_3(%arg0: i32) -> (i32, i32) {
    %c0_i32 = arith.constant 0 : i32
    %c0_i32_0 = arith.constant 0 : i32
    return %c0_i32, %arg0 : i32, i32
  }
  func.func @transform_4(%arg0: i32) -> (i32, i32) {
    %c0_i32 = arith.constant 0 : i32
    %c0_i32_0 = arith.constant 0 : i32
    %c0_i32_1 = arith.constant 0 : i32
    return %c0_i32, %c0_i32_0 : i32, i32
  }
}

</mosaic_0001>

<llo_original>
// kernel: tpu_custom_call.1
$region0: #{tpu_custom_call.1}
  #allocation0 [shape = 'u32[]', space=smem, size = 0x4, offset = 0x4, fixed_abs, tag = 'smem constant byte address 0x4 - core index']
  #allocation1 [shape = 'u32[144,128]{1,0:T(1,128)}', space=vmem, size = 0x12000, scoped, tag = 'internal scratch']
  #allocation2 [shape = 'f32[8,8]{1,0:T(8,128)}', space=vmem, size = 0x1000, scoped, tag = 'scratch operand']
  #allocation3 [shape = 'f32[1,8]{1,0:T(1,128)}', space=vmem, size = 0x200, scoped, tag = 'scratch operand']
  #allocation4 [shape = 'bf16[1,256]{1,0:T(2,128)(2,1)}', space=vmem, size = 0x400, scoped, tag = 'scratch operand']
  #allocation5 [shape = 'f32[8,8]{1,0:T(8,128)}', space=vmem, size = 0x1000, scoped, tag = 'scratch operand']
  #allocation6 [shape = 's32[1]{0}', space=sflag, size = 0x4, scoped, tag = 'scratch operand']
  #allocation7 [shape = 'f32[1,1]{1,0:T(1,128)S(6)}', space=smem, size = 0x200, scoped, tag = 'scoped memory for tpu_custom_call.1']
  #allocation12 [shape = 's32[]', space=sflag, size = 0x4, offset = 0, fixed_abs, tag = 'sflag constant byte address 0x0 - dummy sync flag']
  #allocation13 [shape = 's32[]', space=sflag, size = 0x4, offset = 0, fixed_abs, tag = 'sflag constant byte address 0x0 - dummy sync flag']
  #allocation14 [shape = 'u32[]', space=smem, size = 0x4, offset = 0x44, fixed_abs, tag = 'smem constant byte address 0x44 - assertion arg 0']
  #allocation15 [shape = 'u32[]', space=smem, size = 0x4, offset = 0x48, fixed_abs, tag = 'smem constant byte address 0x48 - assertion arg 1']
  %s0 = inlined_call_operand.<no memory space> [shape: f32[1,1], index: 0, kind: input, shape index: {}]
  %s1 = inlined_call_operand.vmem [shape: f32[1,8], index: 1, kind: input, shape index: {}]
  %s2 = inlined_call_operand.hbm [shape: f32[8,8], index: 2, kind: input, shape index: {}]
  %s3 = inlined_call_operand.hbm [shape: bf16[8,256], index: 3, kind: input, shape index: {}]
  %s4 = inlined_call_operand.hbm [shape: f32[1,1], index: 4, kind: output, shape index: {}]
  %s5 = sld [smem:[#allocation0]]
  $region45: #{tpu_custom_call.1} parent=0
    _
  %s7 = ssub.s32 1, %s5
  %s8 = scalar_select 0, %s7, %s5
  %9 = sst [smem:[#allocation7]] %s0
  $region1: #{tpu_custom_call.1} parent=0
    #allocation8 [shape = 'u8[4096]{0}', space=vmem, size = 0x1000, scoped, tag = 'input window, operand 3, single buffered']
    #allocation9 [shape = 's32[1]{0}', space=sflag, size = 0x4, scoped, tag = 'scoped memory for tpu_custom_call.1']
    #allocation10 [shape = 's32[1]{0}', space=sflag, size = 0x4, scoped, tag = 'scoped memory for tpu_custom_call.1']
    #allocation11 [shape = 'u8[512]{0}', space=smem, size = 0x200, scoped, tag = 'output window, operand 0, single buffered']
    %10 = vsyncpa [#allocation9], 0
    %11 = vsyncpa [#allocation10], 0
    // Predicated region
    $region2: #{tpu_custom_call.1} parent=1 // pred_check
      _
    $region3: #{tpu_custom_call.1} parent=1 // pred_check_branch
      %13 = sbr.rel (0) target = $region5
    $region4: #{tpu_custom_call.1} parent=1 // pred_region
      _
    $region5: #{tpu_custom_call.1} parent=1 // pred_fallthru
      _
    // Predicated region
    $region6: #{tpu_custom_call.1} parent=1 // pred_check
      _
    $region7: #{tpu_custom_call.1} parent=1 // pred_check_branch
      %15 = sbr.rel (0) target = $region9
    $region8: #{tpu_custom_call.1} parent=1 // pred_region
      _
    $region9: #{tpu_custom_call.1} parent=1 // pred_fallthru
      _
    // Predicated region
    $region10: #{tpu_custom_call.1} parent=1 // pred_check
      _
    $region11: #{tpu_custom_call.1} parent=1 // pred_check_branch
      %17 = sbr.rel (0) target = $region13
    $region12: #{tpu_custom_call.1} parent=1 // pred_region
      %s19 = ssub.s32 128, 128
      %20 = vsyncadd [#allocation9], %s19
      %s22 = sshll.u32 [#allocation8], 4
      %s23 = int_to_ptr.vmem [resolvable:$true] %s22
      %25 = dma.hbm_to_vmem [thread:$0]  %s3, 128, %s23, [#allocation9]
    $region13: #{tpu_custom_call.1} parent=1 // pred_fallthru
      _
    // Predicated region
    $region14: #{tpu_custom_call.1} parent=1 // pred_check
      _
    $region15: #{tpu_custom_call.1} parent=1 // pred_check_branch
      %27 = sbr.rel (0) target = $region17
    $region16: #{tpu_custom_call.1} parent=1 // pred_region
      %28 = dma.done [#allocation9], 128
    $region17: #{tpu_custom_call.1} parent=1 // pred_fallthru
      _
    %p31 = scmp.eq.s32.totalorder 0, 0
    // Predicated region
    $region18: #{tpu_custom_call.1} parent=1 // pred_check
      %p32 = pneg %p31
    $region19: #{tpu_custom_call.1} parent=1 // pred_check_branch
      %34 = sbr.rel (%p32) target = $region21
    $region20: #{tpu_custom_call.1} parent=1 // pred_region
      %vm35 = vcmask 64512
      %36 = vst.msk [vmem:[#allocation2] sm:$0xff] %vm35, 0.0
      %vm37 = vcmask 57344
      %38 = vst.msk [vmem:[#allocation3] sm:$0x1] %vm37, 0.0
      %vm39 = vcmask 1040384
      %vm40 = vsmask.f32 256
      %vm41 = vmand %vm39, %vm40
      %vm42 = vcmask 1041409
      %vm43 = vsmask.f32 1280
      %vm44 = vmand %vm42, %vm43
      %vm45 = vmor %vm44, %vm41
      %v46 = vld [vmem:[#allocation4] sm:$0x3]
      %v47 = vsel %vm45, 1065369472, %v46
      %48 = vst [vmem:[#allocation4] sm:$0x3] %v47
      // Predicated region
      $region22: #{tpu_custom_call.1} parent=20 // pred_check
        _
      $region23: #{tpu_custom_call.1} parent=20 // pred_check_branch
        %50 = sbr.rel target = $region25
      $region24: #{tpu_custom_call.1} parent=20 // pred_region
        %51 = sst [smem:[#allocation14]] [#allocation13]
        %52 = sst [smem:[#allocation15]] [#allocation12]
      $region25: #{tpu_custom_call.1} parent=20 // pred_fallthru
        _
      %54 = shalt.err (0)
      %s56 = sshll.u32 [#allocation5], 4
      %s57 = int_to_ptr.vmem [resolvable:$true] %s56
      %59 = dma.hbm_to_vmem [thread:$0]  %s2, 128, %s57, [#allocation6]
    $region21: #{tpu_custom_call.1} parent=1 // pred_fallthru
      _
    %v60 = vld [vmem:[#allocation8] sm:$0xff]
    %v61 = vld [vmem:[#allocation2] sm:$0xff]
    %v63 = vunpack.c.l.b16 %v60
    %v64 = vunpack.c.h.b16 %v60
    %v65 = vpack.c.b16 %v63, %v63
    %v66 = vpack.c.b16 %v64, %v64
    %69 = vmatprep.subr.bf16.mxu0 0
    %70 = vmatpush1.bf16.xpose.msra.mxu0 0
    %71 = vmatprep.subr.bf16.mxu0 0
    %72 = vmatpush1.bf16.xpose.msra.mxu0 0
    %73 = vmatprep.subr.bf16.mxu0 0
    %74 = vmatpush1.bf16.xpose.msra.mxu0 0
    %75 = vmatprep.subr.bf16.mxu0 0
    %76 = vmatpush1.bf16.xpose.msra.mxu0 0
    %77 = vmatprep.subr.bf16.mxu0 0
    %78 = vmatpush1.bf16.xpose.msra.mxu0 0
    %79 = vmatprep.subr.bf16.mxu0 0
    %80 = vmatpush1.bf16.xpose.msra.mxu0 0
    %81 = vmatprep.subr.bf16.mxu0 0
    %82 = vmatpush1.bf16.xpose.msra.mxu0 0
    %83 = vmatprep.subr.bf16.mxu0 %v66
    %84 = vmatpush1.bf16.xpose.msra.mxu0 %v65
    %85 = vmatprep.subr.bf16.mxu0 0
    %86 = vmatpush2.bf16.xpose.msra.mxu0 0
    %87 = vmatprep.subr.bf16.mxu0 0
    %88 = vmatpush2.bf16.xpose.msra.mxu0 0
    %89 = vmatprep.subr.bf16.mxu0 0
    %90 = vmatpush2.bf16.xpose.msra.mxu0 0
    %91 = vmatprep.subr.bf16.mxu0 0
    %92 = vmatpush2.bf16.xpose.msra.mxu0 0
    %93 = vmatprep.subr.bf16.mxu0 0
    %94 = vmatpush2.bf16.xpose.msra.mxu0 0
    %95 = vmatprep.subr.bf16.mxu0 0
    %96 = vmatpush2.bf16.xpose.msra.mxu0 0
    %97 = vmatprep.subr.bf16.mxu0 0
    %98 = vmatpush2.bf16.xpose.msra.mxu0 0
    %99 = vmatprep.subr.bf16.mxu0 0
    %100 = vmatpush2.bf16.xpose.msra.mxu0 0
    %101 = vmatprep.mubr.bf16.mxu0 %v66
    %102 = vmatmul.mubr.bf16.gmra.mxu0 %v65
    %v103 = vpop.f32.mrf.mxu0
    %v104 = vadd.f32 0.0, %v103
    %v105 = vpop.f32.mrf.mxu0
    %v106 = vpop.f32.mrf.mxu0
    %v107 = vpop.f32.mrf.mxu0
    %108 = vdwg.mxu0
    %v109 = vadd.f32 %v61, %v104
    %vm110 = vcmask 64512
    %111 = vst.msk [vmem:[#allocation2] sm:$0xff] %vm110, %v109
    %v112 = vld [vmem:[#allocation3] sm:$0x1]
    %v113 = vld [vmem:[#allocation4] sm:$0x3]
    %v116 = vunpack.c.l.s4 1966171168
    %v117 = vunpack.c.0.s8 %v116
    %v118 = vlaneseq
    %v119 = vshrl.u32 %v118, 7
    %v120 = vsub.s32 %v117, %v119
    %v121 = vrot.slane %v113, %v120
    %v122 = vcombine.high %v121, %v121
    %v124 = vunpack.c.l.s4 1966171168
    %v125 = vunpack.c.0.s8 %v124
    %v126 = vlaneseq
    %v127 = vshrl.u32 %v126, 7
    %v128 = vsub.s32 %v125, %v127
    %v129 = vrot.slane %v121, %v128
    %v131 = vunpack.c.l.s4 1966171168
    %v132 = vunpack.c.0.s8 %v131
    %v133 = vlaneseq
    %v134 = vshrl.u32 %v133, 7
    %v135 = vsub.s32 %v132, %v134
    %v136 = vrot.slane %v122, %v135
    %139 = vmatprep.subr.bf16.mxu0 0
    %140 = vmatpush1.bf16.xpose.msra.mxu0 0
    %141 = vmatprep.subr.bf16.mxu0 0
    %142 = vmatpush1.bf16.xpose.msra.mxu0 0
    %143 = vmatprep.subr.bf16.mxu0 0
    %144 = vmatpush1.bf16.xpose.msra.mxu0 0
    %145 = vmatprep.subr.bf16.mxu0 0
    %146 = vmatpush1.bf16.xpose.msra.mxu0 0
    %147 = vmatprep.subr.bf16.mxu0 0
    %148 = vmatpush1.bf16.xpose.msra.mxu0 0
    %149 = vmatprep.subr.bf16.mxu0 0
    %150 = vmatpush1.bf16.xpose.msra.mxu0 0
    %151 = vmatprep.subr.bf16.mxu0 0
    %152 = vmatpush1.bf16.xpose.msra.mxu0 0
    %153 = vmatprep.subr.bf16.mxu0 %v66
    %154 = vmatpush1.bf16.xpose.msra.mxu0 %v65
    %155 = vmatprep.subr.bf16.mxu0 0
    %156 = vmatpush2.bf16.xpose.msra.mxu0 0
    %157 = vmatprep.subr.bf16.mxu0 0
    %158 = vmatpush2.bf16.xpose.msra.mxu0 0
    %159 = vmatprep.subr.bf16.mxu0 0
    %160 = vmatpush2.bf16.xpose.msra.mxu0 0
    %161 = vmatprep.subr.bf16.mxu0 0
    %162 = vmatpush2.bf16.xpose.msra.mxu0 0
    %163 = vmatprep.subr.bf16.mxu0 0
    %164 = vmatpush2.bf16.xpose.msra.mxu0 0
    %165 = vmatprep.subr.bf16.mxu0 0
    %166 = vmatpush2.bf16.xpose.msra.mxu0 0
    %167 = vmatprep.subr.bf16.mxu0 0
    %168 = vmatpush2.bf16.xpose.msra.mxu0 0
    %169 = vmatprep.subr.bf16.mxu0 0
    %170 = vmatpush2.bf16.xpose.msra.mxu0 0
    %171 = vmatprep.mubr.bf16.mxu0 %v136
    %172 = vmatmul.mubr.bf16.gmra.mxu0 %v129
    %v173 = vpop.f32.mrf.mxu0
    %v174 = vadd.f32 0.0, %v173
    %v175 = vpop.f32.mrf.mxu0
    %v176 = vpop.f32.mrf.mxu0
    %v177 = vpop.f32.mrf.mxu0
    %178 = vdwg.mxu0
    %v179 = vadd.f32 %v112, %v174
    %vm180 = vcmask 57344
    %181 = vst.msk [vmem:[#allocation3] sm:$0x1] %vm180, %v179
    // Predicated region
    $region26: #{tpu_custom_call.1} parent=1 // pred_check
      %p182 = pneg %p31
    $region27: #{tpu_custom_call.1} parent=1 // pred_check_branch
      %184 = sbr.rel (%p182) target = $region29
    $region28: #{tpu_custom_call.1} parent=1 // pred_region
      %v185 = vlaneseq
      %v186 = vshrl.u32 %v185, 7
      %v187 = vlaneseq
      %v188 = vand.u32 %v187, 127
      %vm189 = vcmp.eq.s32.totalorder %v186, %v188
      %v190 = vsel %vm189, 1, 0
      %v191 = vcvt.s32.f32 %v190
      %v192 = vld [vmem:[#allocation3] sm:$0x1]
      %193 = vxpose.xlu0.b32.start [1/16] %v192, 128
      %194 = vxpose.xlu0.b32.cont [2/16] 0.0, 128
      %195 = vxpose.xlu0.b32.cont [3/16] 0.0, 128
      %196 = vxpose.xlu0.b32.cont [4/16] 0.0, 128
      %197 = vxpose.xlu0.b32.cont [5/16] 0.0, 128
      %198 = vxpose.xlu0.b32.cont [6/16] 0.0, 128
      %199 = vxpose.xlu0.b32.cont [7/16] 0.0, 128
      %200 = vxpose.xlu0.b32.cont [8/16] 0.0, 128
      %201 = vxpose.xlu0.b32.cont [9/16] 0.0, 128
      %202 = vxpose.xlu0.b32.cont [10/16] 0.0, 128
      %203 = vxpose.xlu0.b32.cont [11/16] 0.0, 128
      %204 = vxpose.xlu0.b32.cont [12/16] 0.0, 128
      %205 = vxpose.xlu0.b32.cont [13/16] 0.0, 128
      %206 = vxpose.xlu0.b32.cont [14/16] 0.0, 128
      %207 = vxpose.xlu0.b32.cont [15/16] 0.0, 128
      %208 = vxpose.xlu0.b32.end [16/16] 0.0, 128
      %v209 = vpop.trf.xlu0
      %v210 = vpop.trf.xlu0
      %v211 = vpop.trf.xlu0
      %v212 = vpop.trf.xlu0
      %v213 = vpop.trf.xlu0
      %v214 = vpop.trf.xlu0
      %v215 = vpop.trf.xlu0
      %v216 = vpop.trf.xlu0
      %v217 = vpop.trf.xlu0
      %v218 = vpop.trf.xlu0
      %v219 = vpop.trf.xlu0
      %v220 = vpop.trf.xlu0
      %v221 = vpop.trf.xlu0
      %v222 = vpop.trf.xlu0
      %v223 = vpop.trf.xlu0
      %v224 = vpop.trf.xlu0
      %vm225 = vcmask 7168
      %v227 = vsel %vm225, %v209, 0
      %vm229 = vcmask 1040384
      %v231 = vsel %vm229, %v192, 0
      %233 = vmatprep.subr.mxu0 0.0
      %234 = vmatpush1.msra.mxu0 0.0
      %235 = vmatprep.subr.mxu0 0.0
      %236 = vmatpush1.msra.mxu0 0.0
      %237 = vmatprep.subr.mxu0 0.0
      %238 = vmatpush1.msra.mxu0 0.0
      %239 = vmatprep.subr.mxu0 0.0
      %240 = vmatpush1.msra.mxu0 0.0
      %241 = vmatprep.subr.mxu0 0.0
      %242 = vmatpush1.msra.mxu0 0.0
      %243 = vmatprep.subr.mxu0 0.0
      %244 = vmatpush1.msra.mxu0 0.0
      %245 = vmatprep.subr.mxu0 0.0
      %246 = vmatpush1.msra.mxu0 0.0
      %247 = vmatprep.subr.mxu0 0.0
      %248 = vmatpush1.msra.mxu0 0.0
      %249 = vmatprep.subr.mxu0 0.0
      %250 = vmatpush1.msra.mxu0 0.0
      %251 = vmatprep.subr.mxu0 0.0
      %252 = vmatpush1.msra.mxu0 0.0
      %253 = vmatprep.subr.mxu0 0.0
      %254 = vmatpush1.msra.mxu0 0.0
      %255 = vmatprep.subr.mxu0 0.0
      %256 = vmatpush1.msra.mxu0 0.0
      %257 = vmatprep.subr.mxu0 0.0
      %258 = vmatpush1.msra.mxu0 0.0
      %259 = vmatprep.subr.mxu0 0.0
      %260 = vmatpush1.msra.mxu0 0.0
      %261 = vmatprep.subr.mxu0 0.0
      %262 = vmatpush1.msra.mxu0 0.0
      %263 = vmatprep.subr.mxu0 0.0
      %264 = vmatpush1.msra.mxu0 %v231
      %265 = vmatprep.subr.mxu0 0.0
      %266 = vmatpush2.msra.mxu0 0.0
      %267 = vmatprep.subr.mxu0 0.0
      %268 = vmatpush2.msra.mxu0 0.0
      %269 = vmatprep.subr.mxu0 0.0
      %270 = vmatpush2.msra.mxu0 0.0
      %271 = vmatprep.subr.mxu0 0.0
      %272 = vmatpush2.msra.mxu0 0.0
      %273 = vmatprep.subr.mxu0 0.0
      %274 = vmatpush2.msra.mxu0 0.0
      %275 = vmatprep.subr.mxu0 0.0
      %276 = vmatpush2.msra.mxu0 0.0
      %277 = vmatprep.subr.mxu0 0.0
      %278 = vmatpush2.msra.mxu0 0.0
      %279 = vmatprep.subr.mxu0 0.0
      %280 = vmatpush2.msra.mxu0 0.0
      %281 = vmatprep.subr.mxu0 0.0
      %282 = vmatpush2.msra.mxu0 0.0
      %283 = vmatprep.subr.mxu0 0.0
      %284 = vmatpush2.msra.mxu0 0.0
      %285 = vmatprep.subr.mxu0 0.0
      %286 = vmatpush2.msra.mxu0 0.0
      %287 = vmatprep.subr.mxu0 0.0
      %288 = vmatpush2.msra.mxu0 0.0
      %289 = vmatprep.subr.mxu0 0.0
      %290 = vmatpush2.msra.mxu0 0.0
      %291 = vmatprep.subr.mxu0 0.0
      %292 = vmatpush2.msra.mxu0 0.0
      %293 = vmatprep.subr.mxu0 0.0
      %294 = vmatpush2.msra.mxu0 0.0
      %295 = vmatprep.subr.mxu0 0.0
      %296 = vmatpush2.msra.mxu0 0.0
      %297 = vmatprep.mubr.f32.mxu0 0.0
      %298 = vmatmul.mubr.f32.gmra.mxu0 %v227
      %v299 = vpop.f32.mrf.mxu0
      %v300 = vadd.f32 0.0, %v299
      %v301 = vpop.f32.mrf.mxu0
      %302 = vdwg.mxu0
      %v303 = vld [vmem:[#allocation2] sm:$0xff]
      %v304 = vmul.f32 %v300, 0.00390625
      %v305 = vsub.f32 %v303, %v304
      %v306 = vmul.f32 %v305, 0.00390625
      %v307 = vmul.f32 %v191, 3.90625e-09
      %v308 = vadd.f32 %v306, %v307
      %v309 = vmul.f32 %v308, %v191
      %v310 = vsel %vm110, %v309, 0.0
      %311 = vadd.xlane.f32.xlu0 %v310
      %v312 = vpop.xlane.xlu0 %311
      %v313 = vrot.slane %v312, 4
      %v314 = vadd.f32 %v312, %v313
      %v315 = vrot.slane %v314, 2
      %v316 = vadd.f32 %v314, %v315
      %v317 = vrot.slane %v316, 1
      %v318 = vadd.f32 %v316, %v317
      %s319 = vtos %v318
      %v320 = vmul.f32 %v192, 0.00390625
      %v321 = vld [vmem:[%s1] sm:$0x1]
      %v322 = vsub.f32 %v320, %v321
      %v323 = vmul.f32 %v322, %v322
      %v324 = vsel %vm180, %v323, 0.0
      %325 = vadd.xlane.f32.xlu0 %v324
      %v326 = vpop.xlane.xlu0 %325
      %v327 = vrot.slane %v326, 4
      %v328 = vadd.f32 %v326, %v327
      %v329 = vrot.slane %v328, 2
      %v330 = vadd.f32 %v328, %v329
      %v331 = vrot.slane %v330, 1
      %v332 = vadd.f32 %v330, %v331
      %s333 = vtos %v332
      %v334 = vmul.f32 %v308, %v308
      %v335 = vsel %vm110, %v334, 0.0
      %336 = vadd.xlane.f32.xlu0 %v335
      %v337 = vpop.xlane.xlu0 %336
      %v338 = vrot.slane %v337, 4
      %v339 = vadd.f32 %v337, %v338
      %v340 = vrot.slane %v339, 2
      %v341 = vadd.f32 %v339, %v340
      %v342 = vrot.slane %v341, 1
      %v343 = vadd.f32 %v341, %v342
      %s344 = vtos %v343
      %v345 = vstv %s344
      %v346 = vrsqrt.pop %v345
      %v347 = vmul.f32 %v345, %v346
      %vm348 = vcmp.eq.f32.partialorder %v345, inf
      %v349 = vsel %vm348, %v345, %v347
      %vm350 = vcmp.eq.f32.partialorder %v345, 0.0
      %v351 = vand.u32 %v345, 2147483648
      %v352 = vsel %vm350, %v351, %v349
      %s353 = vtos %v352
      %v354 = vstv %s353
      %v355 = vrcp.pop %v354
      %v356 = vmul.f32 %v308, %v355
      %v357 = vmul.f32 %v191, 3.0
      loop: start=0, step=1, limit=15
      $region30: #{tpu_custom_call.1} parent=28 // loop_pre_header
        _
      $region31: #{tpu_custom_call.1} parent=28 // loop_header
        %s359 = sphi 0, %s363
        %p360 = scmp.ge.s32.totalorder %s359, 15
        %v364 = vphi %v356, %v511
        %v365 = vphi %v191, %v584
      $region32: #{tpu_custom_call.1} parent=28 // loop_header_branch
        %362 = sbr.rel (%p360) target = $region36
      $region33: #{tpu_custom_call.1} parent=28 // loop_body
        %v367 = vsel %vm110, %v365, 0
        %369 = vmatprep.subr.mxu0 0.0
        %370 = vmatpush1.msra.mxu0 0.0
        %371 = vmatprep.subr.mxu0 0.0
        %372 = vmatpush1.msra.mxu0 0.0
        %373 = vmatprep.subr.mxu0 0.0
        %374 = vmatpush1.msra.mxu0 0.0
        %375 = vmatprep.subr.mxu0 0.0
        %376 = vmatpush1.msra.mxu0 0.0
        %377 = vmatprep.subr.mxu0 0.0
        %378 = vmatpush1.msra.mxu0 0.0
        %379 = vmatprep.subr.mxu0 0.0
        %380 = vmatpush1.msra.mxu0 0.0
        %381 = vmatprep.subr.mxu0 0.0
        %382 = vmatpush1.msra.mxu0 0.0
        %383 = vmatprep.subr.mxu0 0.0
        %384 = vmatpush1.msra.mxu0 0.0
        %385 = vmatprep.subr.mxu0 0.0
        %386 = vmatpush1.msra.mxu0 0.0
        %387 = vmatprep.subr.mxu0 0.0
        %388 = vmatpush1.msra.mxu0 0.0
        %389 = vmatprep.subr.mxu0 0.0
        %390 = vmatpush1.msra.mxu0 0.0
        %391 = vmatprep.subr.mxu0 0.0
        %392 = vmatpush1.msra.mxu0 0.0
        %393 = vmatprep.subr.mxu0 0.0
        %394 = vmatpush1.msra.mxu0 0.0
        %395 = vmatprep.subr.mxu0 0.0
        %396 = vmatpush1.msra.mxu0 0.0
        %397 = vmatprep.subr.mxu0 0.0
        %398 = vmatpush1.msra.mxu0 0.0
        %399 = vmatprep.subr.mxu0 0.0
        %400 = vmatpush1.msra.mxu0 %v364
        %401 = vmatprep.subr.mxu0 0.0
        %402 = vmatpush2.msra.mxu0 0.0
        %403 = vmatprep.subr.mxu0 0.0
        %404 = vmatpush2.msra.mxu0 0.0
        %405 = vmatprep.subr.mxu0 0.0
        %406 = vmatpush2.msra.mxu0 0.0
        %407 = vmatprep.subr.mxu0 0.0
        %408 = vmatpush2.msra.mxu0 0.0
        %409 = vmatprep.subr.mxu0 0.0
        %410 = vmatpush2.msra.mxu0 0.0
        %411 = vmatprep.subr.mxu0 0.0
        %412 = vmatpush2.msra.mxu0 0.0
        %413 = vmatprep.subr.mxu0 0.0
        %414 = vmatpush2.msra.mxu0 0.0
        %415 = vmatprep.subr.mxu0 0.0
        %416 = vmatpush2.msra.mxu0 0.0
        %417 = vmatprep.subr.mxu0 0.0
        %418 = vmatpush2.msra.mxu0 0.0
        %419 = vmatprep.subr.mxu0 0.0
        %420 = vmatpush2.msra.mxu0 0.0
        %421 = vmatprep.subr.mxu0 0.0
        %422 = vmatpush2.msra.mxu0 0.0
        %423 = vmatprep.subr.mxu0 0.0
        %424 = vmatpush2.msra.mxu0 0.0
        %425 = vmatprep.subr.mxu0 0.0
        %426 = vmatpush2.msra.mxu0 0.0
        %427 = vmatprep.subr.mxu0 0.0
        %428 = vmatpush2.msra.mxu0 0.0
        %429 = vmatprep.subr.mxu0 0.0
        %430 = vmatpush2.msra.mxu0 0.0
        %431 = vmatprep.subr.mxu0 0.0
        %432 = vmatpush2.msra.mxu0 0.0
        %433 = vmatprep.mubr.f32.mxu0 0.0
        %434 = vmatmul.mubr.f32.gmra.mxu0 %v367
        %v435 = vpop.f32.mrf.mxu0
        %v436 = vadd.f32 0.0, %v435
        %v437 = vpop.f32.mrf.mxu0
        %438 = vdwg.mxu0
        %v439 = vsub.f32 %v357, %v436
        %v440 = vmul.f32 %v439, 0.5
        %v442 = vsel %vm110, %v364, 0
        %444 = vmatprep.subr.mxu0 0.0
        %445 = vmatpush1.msra.mxu0 0.0
        %446 = vmatprep.subr.mxu0 0.0
        %447 = vmatpush1.msra.mxu0 0.0
        %448 = vmatprep.subr.mxu0 0.0
        %449 = vmatpush1.msra.mxu0 0.0
        %450 = vmatprep.subr.mxu0 0.0
        %451 = vmatpush1.msra.mxu0 0.0
        %452 = vmatprep.subr.mxu0 0.0
        %453 = vmatpush1.msra.mxu0 0.0
        %454 = vmatprep.subr.mxu0 0.0
        %455 = vmatpush1.msra.mxu0 0.0
        %456 = vmatprep.subr.mxu0 0.0
        %457 = vmatpush1.msra.mxu0 0.0
        %458 = vmatprep.subr.mxu0 0.0
        %459 = vmatpush1.msra.mxu0 0.0
        %460 = vmatprep.subr.mxu0 0.0
        %461 = vmatpush1.msra.mxu0 0.0
        %462 = vmatprep.subr.mxu0 0.0
        %463 = vmatpush1.msra.mxu0 0.0
        %464 = vmatprep.subr.mxu0 0.0
        %465 = vmatpush1.msra.mxu0 0.0
        %466 = vmatprep.subr.mxu0 0.0
        %467 = vmatpush1.msra.mxu0 0.0
        %468 = vmatprep.subr.mxu0 0.0
        %469 = vmatpush1.msra.mxu0 0.0
        %470 = vmatprep.subr.mxu0 0.0
        %471 = vmatpush1.msra.mxu0 0.0
        %472 = vmatprep.subr.mxu0 0.0
        %473 = vmatpush1.msra.mxu0 0.0
        %474 = vmatprep.subr.mxu0 0.0
        %475 = vmatpush1.msra.mxu0 %v440
        %476 = vmatprep.subr.mxu0 0.0
        %477 = vmatpush2.msra.mxu0 0.0
        %478 = vmatprep.subr.mxu0 0.0
        %479 = vmatpush2.msra.mxu0 0.0
        %480 = vmatprep.subr.mxu0 0.0
        %481 = vmatpush2.msra.mxu0 0.0
        %482 = vmatprep.subr.mxu0 0.0
        %483 = vmatpush2.msra.mxu0 0.0
        %484 = vmatprep.subr.mxu0 0.0
        %485 = vmatpush2.msra.mxu0 0.0
        %486 = vmatprep.subr.mxu0 0.0
        %487 = vmatpush2.msra.mxu0 0.0
        %488 = vmatprep.subr.mxu0 0.0
        %489 = vmatpush2.msra.mxu0 0.0
        %490 = vmatprep.subr.mxu0 0.0
        %491 = vmatpush2.msra.mxu0 0.0
        %492 = vmatprep.subr.mxu0 0.0
        %493 = vmatpush2.msra.mxu0 0.0
        %494 = vmatprep.subr.mxu0 0.0
        %495 = vmatpush2.msra.mxu0 0.0
        %496 = vmatprep.subr.mxu0 0.0
        %497 = vmatpush2.msra.mxu0 0.0
        %498 = vmatprep.subr.mxu0 0.0
        %499 = vmatpush2.msra.mxu0 0.0
        %500 = vmatprep.subr.mxu0 0.0
        %501 = vmatpush2.msra.mxu0 0.0
        %502 = vmatprep.subr.mxu0 0.0
        %503 = vmatpush2.msra.mxu0 0.0
        %504 = vmatprep.subr.mxu0 0.0
        %505 = vmatpush2.msra.mxu0 0.0
        %506 = vmatprep.subr.mxu0 0.0
        %507 = vmatpush2.msra.mxu0 0.0
        %508 = vmatprep.mubr.f32.mxu0 0.0
        %509 = vmatmul.mubr.f32.gmra.mxu0 %v442
        %v510 = vpop.f32.mrf.mxu0
        %v511 = vadd.f32 0.0, %v510
        %v512 = vpop.f32.mrf.mxu0
        %513 = vdwg.mxu0
        %v515 = vsel %vm110, %v440, 0
        %517 = vmatprep.subr.mxu0 0.0
        %518 = vmatpush1.msra.mxu0 0.0
        %519 = vmatprep.subr.mxu0 0.0
        %520 = vmatpush1.msra.mxu0 0.0
        %521 = vmatprep.subr.mxu0 0.0
        %522 = vmatpush1.msra.mxu0 0.0
        %523 = vmatprep.subr.mxu0 0.0
        %524 = vmatpush1.msra.mxu0 0.0
        %525 = vmatprep.subr.mxu0 0.0
        %526 = vmatpush1.msra.mxu0 0.0
        %527 = vmatprep.subr.mxu0 0.0
        %528 = vmatpush1.msra.mxu0 0.0
        %529 = vmatprep.subr.mxu0 0.0
        %530 = vmatpush1.msra.mxu0 0.0
        %531 = vmatprep.subr.mxu0 0.0
        %532 = vmatpush1.msra.mxu0 0.0
        %533 = vmatprep.subr.mxu0 0.0
        %534 = vmatpush1.msra.mxu0 0.0
        %535 = vmatprep.subr.mxu0 0.0
        %536 = vmatpush1.msra.mxu0 0.0
        %537 = vmatprep.subr.mxu0 0.0
        %538 = vmatpush1.msra.mxu0 0.0
        %539 = vmatprep.subr.mxu0 0.0
        %540 = vmatpush1.msra.mxu0 0.0
        %541 = vmatprep.subr.mxu0 0.0
        %542 = vmatpush1.msra.mxu0 0.0
        %543 = vmatprep.subr.mxu0 0.0
        %544 = vmatpush1.msra.mxu0 0.0
        %545 = vmatprep.subr.mxu0 0.0
        %546 = vmatpush1.msra.mxu0 0.0
        %547 = vmatprep.subr.mxu0 0.0
        %548 = vmatpush1.msra.mxu0 %v365
        %549 = vmatprep.subr.mxu0 0.0
        %550 = vmatpush2.msra.mxu0 0.0
        %551 = vmatprep.subr.mxu0 0.0
        %552 = vmatpush2.msra.mxu0 0.0
        %553 = vmatprep.subr.mxu0 0.0
        %554 = vmatpush2.msra.mxu0 0.0
        %555 = vmatprep.subr.mxu0 0.0
        %556 = vmatpush2.msra.mxu0 0.0
        %557 = vmatprep.subr.mxu0 0.0
        %558 = vmatpush2.msra.mxu0 0.0
        %559 = vmatprep.subr.mxu0 0.0
        %560 = vmatpush2.msra.mxu0 0.0
        %561 = vmatprep.subr.mxu0 0.0
        %562 = vmatpush2.msra.mxu0 0.0
        %563 = vmatprep.subr.mxu0 0.0
        %564 = vmatpush2.msra.mxu0 0.0
        %565 = vmatprep.subr.mxu0 0.0
        %566 = vmatpush2.msra.mxu0 0.0
        %567 = vmatprep.subr.mxu0 0.0
        %568 = vmatpush2.msra.mxu0 0.0
        %569 = vmatprep.subr.mxu0 0.0
        %570 = vmatpush2.msra.mxu0 0.0
        %571 = vmatprep.subr.mxu0 0.0
        %572 = vmatpush2.msra.mxu0 0.0
        %573 = vmatprep.subr.mxu0 0.0
        %574 = vmatpush2.msra.mxu0 0.0
        %575 = vmatprep.subr.mxu0 0.0
        %576 = vmatpush2.msra.mxu0 0.0
        %577 = vmatprep.subr.mxu0 0.0
        %578 = vmatpush2.msra.mxu0 0.0
        %579 = vmatprep.subr.mxu0 0.0
        %580 = vmatpush2.msra.mxu0 0.0
        %581 = vmatprep.mubr.f32.mxu0 0.0
        %582 = vmatmul.mubr.f32.gmra.mxu0 %v515
        %v583 = vpop.f32.mrf.mxu0
        %v584 = vadd.f32 0.0, %v583
        %v585 = vpop.f32.mrf.mxu0
        %586 = vdwg.mxu0
      $region34: #{tpu_custom_call.1} parent=28 // loop_footer
        %s363 = sadd.s32 1, %s359
      $region35: #{tpu_custom_call.1} parent=28 // loop_footer_branch
        %358 = sbr.rel target = $region31
      $region36: #{tpu_custom_call.1} parent=28 // loop_exit
        _
      %v587 = vstv %s353
      %v588 = vrsqrt.pop %v587
      %v589 = vmul.f32 %v587, %v588
      %vm590 = vcmp.eq.f32.partialorder %v587, inf
      %v591 = vsel %vm590, %v587, %v589
      %vm592 = vcmp.eq.f32.partialorder %v587, 0.0
      %v593 = vand.u32 %v587, 2147483648
      %v594 = vsel %vm592, %v593, %v591
      %s595 = vtos %v594
      %v596 = vstv %s595
      %v597 = vmul.f32 %v364, %v596
      %s598 = smul.u32 8, 1
      %s599 = sshll.u32 %s598, 4
      %600 = dma.done [#allocation6], %s599
      %v601 = vld [vmem:[#allocation5] sm:$0xff]
      %v602 = vmul.f32 %v597, %v601
      %v603 = vsel %vm110, %v602, 0.0
      %604 = vadd.xlane.f32.xlu0 %v603
      %v605 = vpop.xlane.xlu0 %604
      %v606 = vrot.slane %v605, 4
      %v607 = vadd.f32 %v605, %v606
      %v608 = vrot.slane %v607, 2
      %v609 = vadd.f32 %v607, %v608
      %v610 = vrot.slane %v609, 1
      %v611 = vadd.f32 %v609, %v610
      %s612 = vtos %v611
      %s613 = sadd.f32 %s333, %s319
      %s614 = sld [smem:[#allocation7]]
      %s615 = sadd.f32 %s613, %s614
      %s616 = smul.f32 %s612, 2.0
      %s617 = ssub.f32 %s615, %s616
      %v618 = vrcp.pop 4.0
      %s619 = vtos %v618
      %s620 = smul.f32 %s617, %s619
      %s621 = scalar_lea.smem [#allocation11], 0
      %622 = sst [smem:[%s621]] %s620
    $region29: #{tpu_custom_call.1} parent=1 // pred_fallthru
      _
    // Predicated region
    $region37: #{tpu_custom_call.1} parent=1 // pred_check
      _
    $region38: #{tpu_custom_call.1} parent=1 // pred_check_branch
      %624 = sbr.rel (0) target = $region40
    $region39: #{tpu_custom_call.1} parent=1 // pred_region
      %s626 = ssub.s32 16, 16
      %627 = vsyncadd [#allocation10], %s626
      %630 = dma.smem_to_hbm [#allocation11], 16, %s4, [#allocation10]
    $region40: #{tpu_custom_call.1} parent=1 // pred_fallthru
      _
    // Predicated region
    $region41: #{tpu_custom_call.1} parent=1 // pred_check
      _
    $region42: #{tpu_custom_call.1} parent=1 // pred_check_branch
      %632 = sbr.rel (0) target = $region44
    $region43: #{tpu_custom_call.1} parent=1 // pred_region
      %633 = dma.done [#allocation10], 16
    $region44: #{tpu_custom_call.1} parent=1 // pred_fallthru
      _
    %634 = sfence
    %635 = vsyncpa [#allocation9], 1
    %636 = vsyncpa [#allocation10], 1
  %637 = vsyncmov [#allocation6]
  %s638 = vpop.sfrf %637
  %p639 = scmp.eq.s32.totalorder %s638, 0
  %p640 = pneg %p639
  %642 = shalt.err (%p640)

</llo_original>
